<compile_context>
chip_gen: v7x
topology: tpu7x:2x2x1
jax: 0.10.0
libtpu: 0.0.40
codegen_flags: <defaults>
</compile_context>

<pallas_src>
import functools

import jax
import jax.numpy as jnp
from jax.experimental import pallas as pl
from jax.experimental.pallas import tpu as pltpu


# ---------------------------------------------------------------------------
# Kernels
# ---------------------------------------------------------------------------

def _smooth_ce_kernel_idx(x_ref, t_ref, o_ref, *, eps):
    """Targets given as int class indices, shape (TB, 1).

    Uses the algebraic form of label-smoothed CE so no full-tile one-hot /
    smoothing / t*logp work is needed.
    """
    x = x_ref[...].astype(jnp.float32)               # (TB, N)
    tb, n = x.shape
    tgt = t_ref[...]                                  # (TB, 1) int32

    # numerically stable logsumexp along the class (lane) axis
    m = jnp.max(x, axis=-1, keepdims=True)
    lse = m + jnp.log(jnp.sum(jnp.exp(x - m), axis=-1, keepdims=True))

    # extract x[row, tgt[row]] with an iota-compare masked sum (XLU reduce)
    classes = jax.lax.broadcasted_iota(jnp.int32, (tb, n), 1)
    x_tgt = jnp.sum(jnp.where(classes == tgt, x, 0.0), axis=-1, keepdims=True)

    if eps > 0.0 and n > 1:
        off = eps / (n - 1)                           # weight of each non-target class
        w_t = (1.0 - eps) - off                       # extra weight of the target class
        sum_x = jnp.sum(x, axis=-1, keepdims=True)
        loss = w_t * (lse - x_tgt) + off * (n * lse - sum_x)
    else:
        loss = lse - x_tgt
    o_ref[...] = loss


def _smooth_ce_kernel_dense(x_ref, t_ref, o_ref, *, eps):
    """Targets given as dense floats, shape (TB, N)."""
    x = x_ref[...].astype(jnp.float32)                # (TB, N)
    _, n = x.shape
    t = t_ref[...].astype(jnp.float32)                # (TB, N)
    if eps > 0.0 and n > 1:
        t = t * (1.0 - eps) + (1.0 - t) * (eps / (n - 1))
    m = jnp.max(x, axis=-1, keepdims=True)
    lse = m + jnp.log(jnp.sum(jnp.exp(x - m), axis=-1, keepdims=True))
    logp = x - lse
    o_ref[...] = -jnp.sum(t * logp, axis=-1, keepdims=True)


# ---------------------------------------------------------------------------
# Wrapper
# ---------------------------------------------------------------------------

def _round_up(a, b):
    return -(-a // b) * b


def _choose_tb(bs, row_bytes, target_tile_bytes=8 << 20):
    """Pick the batch tile: as big as the VMEM budget allows, multiple of 8."""
    tb = max(8, min(1024, target_tile_bytes // (2 * row_bytes)))  # 2x: double buffer
    tb = (tb // 8) * 8
    tb = min(tb, _round_up(bs, 8))
    # Keep several grid steps so the "parallel" axis can be sharded across
    # TensorCores (v7x megacore) and the pipeline stays deep.
    while tb >= 16 and -(-bs // tb) < 4:
        tb = max(8, ((tb // 2) // 8) * 8)
        if tb == 8:
            break
    return tb


def smooth_cross_entropy_loss(inputs, targets, eps=0.0, *, tb=None):
    """Pallas implementation of SmoothCrossEntropyLoss.forward.

    Args:
      inputs: [bs, n_class] float logits (f32 or bf16).
      targets: [bs] int class indices or [bs, n_class] dense targets.
      eps: label-smoothing value.
      tb: optional batch tile override (multiple of 8). Auto-sized if None.

    Returns:
      [bs] float32 per-sample losses (no mean, matching the PyTorch module).
    """
    bs, n = inputs.shape
    eps = float(eps)
    x_bytes = jnp.dtype(inputs.dtype).itemsize

    use_index_path = (targets.ndim == 1)
    if use_index_path:
        t_row_bytes = 4
    else:
        t_row_bytes = n * jnp.dtype(targets.dtype).itemsize

    if tb is None:
        tb = _choose_tb(bs, n * x_bytes + t_row_bytes)
    assert tb % 8 == 0 and tb > 0

    bs_pad = _round_up(bs, tb)
    grid = (bs_pad // tb,)

    # Pad the batch dimension so bs_pad % tb == 0 (padded rows are discarded).
    x = inputs
    if bs_pad != bs:
        x = jnp.pad(x, ((0, bs_pad - bs), (0, 0)))

    x_spec = pl.BlockSpec((tb, n), lambda i: (i, 0))
    out_shape = jax.ShapeDtypeStruct((bs_pad, 1), jnp.float32)
    out_spec = pl.BlockSpec((tb, 1), lambda i: (i, 0))

    if use_index_path:
        tgt = targets.astype(jnp.int32).reshape(bs, 1)
        if bs_pad != bs:
            tgt = jnp.pad(tgt, ((0, bs_pad - bs), (0, 0)))
        kernel = functools.partial(_smooth_ce_kernel_idx, eps=eps)
        t_spec = pl.BlockSpec((tb, 1), lambda i: (i, 0))
    else:
        tgt = targets
        if bs_pad != bs:
            tgt = jnp.pad(tgt, ((0, bs_pad - bs), (0, 0)))
        kernel = functools.partial(_smooth_ce_kernel_dense, eps=eps)
        t_spec = pl.BlockSpec((tb, n), lambda i: (i, 0))

    loss = pl.pallas_call(
        kernel,
        out_shape=out_shape,
        grid_spec=pltpu.PrefetchScalarGridSpec(
            num_scalar_prefetch=0,
            grid=grid,
            in_specs=[x_spec, t_spec],
            out_specs=out_spec,
        ),
        compiler_params=pltpu.CompilerParams(
            dimension_semantics=("parallel",),
            vmem_limit_bytes=32 << 20,
        ),
    )(x, tgt)
    return loss[:bs, 0]


# ---------------------------------------------------------------------------
# Pure-JAX reference (mirrors the PyTorch module)
# ---------------------------------------------------------------------------

def _reference(inputs, targets, eps):
    x = inputs.astype(jnp.float32)
    n = x.shape[1]
    if targets.ndim == 1:
        t = jax.nn.one_hot(targets, n, dtype=jnp.float32)
    else:
        t = targets.astype(jnp.float32)
    if eps > 0:
        t = t * (1 - eps) + (1 - t) * eps / (n - 1)
    logp = jax.nn.log_softmax(x, axis=1)
    return (-t * logp).sum(-1)


if __name__ == "__main__":
    key = jax.random.PRNGKey(0)
    k1, k2, k3, k4 = jax.random.split(key, 4)

    bs, n_class = 8, 32
    eps = 0.1

    logits = jax.random.normal(k1, (bs, n_class), dtype=jnp.float32)
    labels = jax.random.randint(k2, (bs,), 0, n_class, dtype=jnp.int32)

    # 1) class-index targets, f32 logits
    loss_idx = jax.block_until_ready(
        smooth_cross_entropy_loss(logits, labels, eps=eps))
    ref_idx = _reference(logits, labels, eps)
    assert loss_idx.shape == (bs,)
    assert jnp.allclose(loss_idx, ref_idx, atol=1e-5, rtol=1e-5)

    # 2) dense (one-hot) targets
    dense_targets = jax.nn.one_hot(labels, n_class, dtype=jnp.float32)
    loss_dense = jax.block_until_ready(
        smooth_cross_entropy_loss(logits, dense_targets, eps=eps))
    ref_dense = _reference(logits, dense_targets, eps)
    assert jnp.allclose(loss_dense, ref_dense, atol=1e-5, rtol=1e-5)

    # 3) batch not a multiple of the tile (exercises padding path)
    bs2 = 10
    logits2 = jax.random.normal(k3, (bs2, n_class), dtype=jnp.float32)
    labels2 = jax.random.randint(k4, (bs2,), 0, n_class, dtype=jnp.int32)
    loss2 = jax.block_until_ready(
        smooth_cross_entropy_loss(logits2, labels2, eps=eps))
    ref2 = _reference(logits2, labels2, eps)
    assert loss2.shape == (bs2,)
    assert jnp.allclose(loss2, ref2, atol=1e-5, rtol=1e-5)

    # 4) bf16 logits (halves HBM traffic; cast to f32 inside the kernel)
    logits_bf16 = logits.astype(jnp.bfloat16)
    loss_bf16 = jax.block_until_ready(
        smooth_cross_entropy_loss(logits_bf16, labels, eps=eps))
    ref_bf16 = _reference(logits_bf16, labels, eps)
    assert jnp.allclose(loss_bf16, ref_bf16, atol=1e-4, rtol=1e-4)

    print("KERNEL_OK")
</pallas_src>

<mosaic_0001>
module attributes {stable_mosaic.version = 11 : i64} {
  func.func @_smooth_ce_kernel_idx(%arg0: i32, %arg1: memref<8x32xf32, #tpu.memory_space<vmem>>, %arg2: memref<8x1xi32, #tpu.memory_space<vmem>>, %arg3: memref<8x1xf32, #tpu.memory_space<vmem>>) attributes {dimension_semantics = [#tpu.dimension_semantics<parallel>], iteration_bounds = array<i64: 1>, scalar_prefetch = 0 : i64, scratch_operands = 0 : i64, tpu.core_type = #tpu.core_type<tc>, window_params = [{transform_indices = @transform_0, window_bounds = array<i64: 8, 32>}, {transform_indices = @transform_1, window_bounds = array<i64: 8, 1>}, {transform_indices = @transform_2, window_bounds = array<i64: 8, 1>}]} {
    %c0 = arith.constant 0 : index
    %c0_0 = arith.constant 0 : index
    %0 = vector.load %arg1[%c0, %c0_0] : memref<8x32xf32, #tpu.memory_space<vmem>>, vector<8x32xf32>
    %c0_1 = arith.constant 0 : index
    %c0_2 = arith.constant 0 : index
    %1 = vector.load %arg2[%c0_1, %c0_2] : memref<8x1xi32, #tpu.memory_space<vmem>>, vector<8x1xi32>
    %cst = arith.constant dense<0xFF800000> : vector<8xf32>
    %2 = vector.multi_reduction <maximumf>, %0, %cst [1] : vector<8x32xf32> to vector<8xf32>
    %3 = vector.shape_cast %2 : vector<8xf32> to vector<8x1xf32>
    %4 = vector.broadcast %3 : vector<8x1xf32> to vector<8x32xf32>
    %5 = arith.subf %0, %4 : vector<8x32xf32>
    %6 = math.exp %5 : vector<8x32xf32>
    %cst_3 = arith.constant dense<0.000000e+00> : vector<8xf32>
    %7 = vector.multi_reduction <add>, %6, %cst_3 [1] : vector<8x32xf32> to vector<8xf32>
    %8 = vector.shape_cast %7 : vector<8xf32> to vector<8x1xf32>
    %9 = math.log %8 : vector<8x1xf32>
    %10 = arith.addf %3, %9 : vector<8x1xf32>
    %11 = tpu.iota {dimensions = array<i32: 1>} : vector<8x32xi32>
    %12 = vector.broadcast %1 : vector<8x1xi32> to vector<8x32xi32>
    %13 = arith.cmpi eq, %11, %12 : vector<8x32xi32>
    %cst_4 = arith.constant 0.000000e+00 : f32
    %14 = vector.broadcast %cst_4 : f32 to vector<8x32xf32>
    %15 = arith.select %13, %0, %14 : vector<8x32xi1>, vector<8x32xf32>
    %cst_5 = arith.constant dense<0.000000e+00> : vector<8xf32>
    %16 = vector.multi_reduction <add>, %15, %cst_5 [1] : vector<8x32xf32> to vector<8xf32>
    %17 = vector.shape_cast %16 : vector<8xf32> to vector<8x1xf32>
    %cst_6 = arith.constant dense<0.000000e+00> : vector<8xf32>
    %18 = vector.multi_reduction <add>, %0, %cst_6 [1] : vector<8x32xf32> to vector<8xf32>
    %19 = vector.shape_cast %18 : vector<8xf32> to vector<8x1xf32>
    %20 = arith.subf %10, %17 : vector<8x1xf32>
    %cst_7 = arith.constant 0.896774172 : f32
    %21 = vector.broadcast %cst_7 : f32 to vector<8x1xf32>
    %22 = arith.mulf %21, %20 : vector<8x1xf32>
    %cst_8 = arith.constant 3.200000e+01 : f32
    %23 = vector.broadcast %cst_8 : f32 to vector<8x1xf32>
    %24 = arith.mulf %23, %10 : vector<8x1xf32>
    %25 = arith.subf %24, %19 : vector<8x1xf32>
    %cst_9 = arith.constant 0.0032258064 : f32
    %26 = vector.broadcast %cst_9 : f32 to vector<8x1xf32>
    %27 = arith.mulf %26, %25 : vector<8x1xf32>
    %28 = arith.addf %22, %27 : vector<8x1xf32>
    %c0_10 = arith.constant 0 : index
    %c0_11 = arith.constant 0 : index
    %29 = vector.load %arg3[%c0_10, %c0_11] : memref<8x1xf32, #tpu.memory_space<vmem>>, vector<8x1xf32>
    tpu.vector_store %arg3[%c0_10, %c0_11], %28 {strides = array<i32>} : memref<8x1xf32, #tpu.memory_space<vmem>>, vector<8x1xf32>,
    return
  }
  func.func @transform_0(%arg0: i32) -> (i32, i32) {
    %c0_i32 = arith.constant 0 : i32
    %c0_i32_0 = arith.constant 0 : i32
    return %arg0, %c0_i32 : i32, i32
  }
  func.func @transform_1(%arg0: i32) -> (i32, i32) {
    %c0_i32 = arith.constant 0 : i32
    %c0_i32_0 = arith.constant 0 : i32
    return %arg0, %c0_i32 : i32, i32
  }
  func.func @transform_2(%arg0: i32) -> (i32, i32) {
    %c0_i32 = arith.constant 0 : i32
    %c0_i32_0 = arith.constant 0 : i32
    return %arg0, %c0_i32 : i32, i32
  }
}

</mosaic_0001>

<llo_original>
// kernel: tpu_custom_call.1
$region0: #{tpu_custom_call.1}
  #allocation0 [shape = 'u32[]', space=smem, size = 0x4, offset = 0x4, fixed_abs, tag = 'smem constant byte address 0x4 - core index']
  #allocation1 [shape = 'u32[144,128]{1,0:T(1,128)}', space=vmem, size = 0x12000, scoped, tag = 'internal scratch']
  %s0 = inlined_call_operand.vmem [shape: f32[8,32], index: 0, kind: input, shape index: {}]
  %s1 = inlined_call_operand.vmem [shape: s32[8,1], index: 1, kind: input, shape index: {}]
  %s2 = inlined_call_operand.vmem [shape: f32[8,1], index: 2, kind: output, shape index: {}]
  %s3 = sld [smem:[#allocation0]]
  $region18: #{tpu_custom_call.1} parent=0
    _
  %s5 = ssub.s32 1, %s3
  %s6 = scalar_select 0, %s5, %s3
  // Predicated region
  $region2: #{tpu_custom_call.1} parent=0 // pred_check
    _
  $region3: #{tpu_custom_call.1} parent=0 // pred_check_branch
    %8 = sbr.rel (0) target = $region5
  $region4: #{tpu_custom_call.1} parent=0 // pred_region
    _
  $region5: #{tpu_custom_call.1} parent=0 // pred_fallthru
    _
  // Predicated region
  $region6: #{tpu_custom_call.1} parent=0 // pred_check
    _
  $region7: #{tpu_custom_call.1} parent=0 // pred_check_branch
    %10 = sbr.rel (0) target = $region9
  $region8: #{tpu_custom_call.1} parent=0 // pred_region
    _
  $region9: #{tpu_custom_call.1} parent=0 // pred_fallthru
    _
  %v11 = vld [vmem:[%s0] sm:$0xff]
  %v12 = vld [vmem:[%s1] sm:$0xff]
  %vm13 = vcmask 261120
  %v14 = vsel %vm13, %v11, -inf
  %15 = vmax.xlane.f32.xlu0 %v14
  %v16 = vpop.xlane.xlu0 %15
  %v17 = vsub.f32 %v11, %v16
  %v18 = vmul.f32 %v17, 1.442695
  %v19 = vpow.pop %v18
  %v20 = vsel %vm13, %v19, 0.0
  %21 = vadd.xlane.f32.xlu0 %v20
  %v22 = vpop.xlane.xlu0 %21
  %v23 = vlog2.pop %v22
  %v24 = vmul.f32 %v23, 0.6931472
  %v25 = vadd.f32 %v16, %v24
  %v26 = vlaneseq
  %v27 = vand.u32 %v26, 127
  %28 = vset.pattern.permute.xlu0 0
  %29 = vperm.xlu0 %28, %v12
  %v30 = vpop.permute.xlu0 %29
  %vm31 = vcmp.eq.s32.totalorder %v27, %v30
  %v32 = vsel %vm31, %v11, 0.0
  %v33 = vsel %vm13, %v32, 0.0
  %34 = vadd.xlane.f32.xlu0 %v33
  %v35 = vpop.xlane.xlu0 %34
  %v36 = vsel %vm13, %v11, 0.0
  %37 = vadd.xlane.f32.xlu0 %v36
  %v38 = vpop.xlane.xlu0 %37
  %v39 = vsub.f32 %v25, %v35
  %v40 = vmul.f32 %v39, 0.8967742
  %v41 = vmul.f32 %v25, 32.0
  %v42 = vsub.f32 %v41, %v38
  %v43 = vmul.f32 %v42, 0.0032258064
  %v44 = vadd.f32 %v40, %v43
  %vm45 = vcmask 7168
  %46 = vst.msk [vmem:[%s2] sm:$0xff] %vm45, %v44
  // Predicated region
  $region10: #{tpu_custom_call.1} parent=0 // pred_check
    _
  $region11: #{tpu_custom_call.1} parent=0 // pred_check_branch
    %48 = sbr.rel (0) target = $region13
  $region12: #{tpu_custom_call.1} parent=0 // pred_region
    _
  $region13: #{tpu_custom_call.1} parent=0 // pred_fallthru
    _
  // Predicated region
  $region14: #{tpu_custom_call.1} parent=0 // pred_check
    _
  $region15: #{tpu_custom_call.1} parent=0 // pred_check_branch
    %50 = sbr.rel (0) target = $region17
  $region16: #{tpu_custom_call.1} parent=0 // pred_region
    _
  $region17: #{tpu_custom_call.1} parent=0 // pred_fallthru
    _

</llo_original>
